<compile_context>
chip_gen: v7x
topology: tpu7x:2x2x1
jax: 0.10.0
libtpu: 0.0.40
codegen_flags: <defaults>
</compile_context>

<pallas_src>
import functools

import jax
import jax.numpy as jnp
from jax.experimental import pallas as pl
from jax.experimental.pallas import tpu as pltpu


def _mask_head_kernel(x_ref, w_ref, b_ref, o_ref):
    """One (batch, spatial-tile) block of: sigmoid(sum_c x[c, :] * w[c] + b).

    x_ref: (1, C, TS) VMEM, input dtype (upcast to f32 in-kernel)
    w_ref: (C,)       SMEM float32   -- 1x1-conv weights (scalars)
    b_ref: (1,)       SMEM float32   -- bias (scalar)
    o_ref: (1, 1, TS) VMEM float32   -- lane-dense confidence tile
    """
    xb = x_ref[...].astype(jnp.float32)            # (1, C, TS)
    C = xb.shape[1]
    # Unrolled VPU FMA over channels (C is tiny); MXU is not involved.
    acc = xb[:, 0:1, :] * w_ref[0]                 # (1, 1, TS)
    for c in range(1, C):
        acc = acc + xb[:, c:c + 1, :] * w_ref[c]
    acc = acc + b_ref[0]
    o_ref[...] = jax.nn.sigmoid(acc)               # exp/recip -> EUP slot


@functools.partial(jax.jit, static_argnames=("ts",))
def _mask_head(x3d, w, b, *, ts):
    """x3d: (B, C, S) -> (B, 1, S) float32 confidence.  `ts` divides S."""
    B, C, S = x3d.shape
    grid = (B, S // ts)
    return pl.pallas_call(
        _mask_head_kernel,
        out_shape=jax.ShapeDtypeStruct((B, 1, S), jnp.float32),
        grid_spec=pltpu.PrefetchScalarGridSpec(
            num_scalar_prefetch=0,
            grid=grid,
            in_specs=[
                # x tile: channels on sublanes, spatial on lanes.
                pl.BlockSpec((1, C, ts), lambda bi, si: (bi, 0, si)),
                # weight / bias: tiny scalar tables in SMEM (no per-step DMA).
                pl.BlockSpec(memory_space=pltpu.MemorySpace.SMEM),
                pl.BlockSpec(memory_space=pltpu.MemorySpace.SMEM),
            ],
            out_specs=pl.BlockSpec((1, 1, ts), lambda bi, si: (bi, 0, si)),
        ),
        compiler_params=pltpu.CompilerParams(
            dimension_semantics=("parallel", "parallel"),
            vmem_limit_bytes=32 * 1024 * 1024,
        ),
    )(x3d, w, b)


def _choose_spatial_tile(S, C, itemsize, max_block_bytes=2 * 1024 * 1024):
    """Largest multiple-of-128 spatial tile that divides S and fits the budget.

    With double buffering the input footprint is 2 * C * ts * itemsize
    <= ~4 MiB, safely below v7x's 64 MiB VMEM and all default scoped limits.
    """
    if S % 128 != 0:
        # TODO(synk): a pl.when-masked tail would avoid a full-extent lane
        # block for ragged spatial sizes; full-S is correct and rare for images.
        return S
    cap = max(128, (max_block_bytes // (C * itemsize)) // 128 * 128)
    ts = min(S, cap)
    while S % ts != 0:      # shrink to a divisor of S (S is a multiple of 128)
        ts -= 128
    return ts


class MaskPredictorPallas:
    """JAX/Pallas realization of the MaskPredictorIF interface.

    forward(data) -> Optional[List[jnp.ndarray]]
    data["x"]: (B, C, H, W) NCHW (matching the PyTorch convention).
    Returns [confidence] with confidence: (B, 1, H, W) float32 in [0, 1].
    """

    def __init__(self, in_channels: int):
        # Deterministic parameter init (synthetic; no checkpoint load).
        kw = jax.random.PRNGKey(42)
        self.weight = (
            jax.random.normal(kw, (in_channels,), dtype=jnp.float32) * 0.1
        )
        self.bias = jnp.zeros((1,), dtype=jnp.float32)

    def _predict(self, data):
        x = data["x"]                       # (B, C, H, W), NCHW
        B, C, H, W = x.shape
        S = H * W
        # Contiguous view-merge of the trailing spatial dims; NO transpose,
        # no dtype cast in the wrapper (kernel upcasts to f32 internally).
        x3d = x.reshape(B, C, S)

        ts = _choose_spatial_tile(S, C, jnp.dtype(x.dtype).itemsize)
        conf3d = _mask_head(x3d, self.weight, self.bias, ts=ts)  # (B, 1, S)
        return [conf3d.reshape(B, 1, H, W)]

    def forward(self, data):
        return self._predict(data)

    __call__ = forward


if __name__ == "__main__":
    B, C, H, W = 2, 4, 16, 16
    key = jax.random.PRNGKey(0)
    x = jax.random.normal(key, (B, C, H, W), dtype=jnp.float32)

    predictor = MaskPredictorPallas(in_channels=C)
    out_list = predictor({"x": x})
    conf = jax.block_until_ready(out_list[0])

    assert conf.shape == (B, 1, H, W), conf.shape
    assert conf.dtype == jnp.float32
    assert bool(jnp.all((conf >= 0.0) & (conf <= 1.0)))

    # Cross-check against a plain-JAX reference of the same synthetic head.
    ref = jax.nn.sigmoid(
        jnp.einsum("bchw,c->bhw", x, predictor.weight)[:, None, :, :]
        + predictor.bias[0]
    )
    assert bool(jnp.allclose(conf, ref, atol=1e-5, rtol=1e-5)), float(
        jnp.max(jnp.abs(conf - ref))
    )

    print("KERNEL_OK")
</pallas_src>

<mosaic_0001>
module attributes {stable_mosaic.version = 11 : i64} {
  func.func @_mask_head_kernel(%arg0: i32, %arg1: i32, %arg2: memref<1x4x256xf32, #tpu.memory_space<vmem>>, %arg3: memref<4xf32, #tpu.memory_space<smem>>, %arg4: memref<1xf32, #tpu.memory_space<smem>>, %arg5: memref<1x1x256xf32, #tpu.memory_space<vmem>>) attributes {dimension_semantics = [#tpu.dimension_semantics<parallel>, #tpu.dimension_semantics<parallel>], iteration_bounds = array<i64: 2, 1>, scalar_prefetch = 0 : i64, scratch_operands = 0 : i64, tpu.core_type = #tpu.core_type<tc>, window_params = [{transform_indices = @transform_0, window_bounds = array<i64: 1, 4, 256>}, {transform_indices = @transform_1, window_bounds = array<i64: 4>}, {transform_indices = @transform_2, window_bounds = array<i64: 1>}, {transform_indices = @transform_3, window_bounds = array<i64: 1, 1, 256>}]} {
    %c0 = arith.constant 0 : index
    %c0_0 = arith.constant 0 : index
    %c0_1 = arith.constant 0 : index
    %0 = vector.load %arg2[%c0, %c0_0, %c0_1] : memref<1x4x256xf32, #tpu.memory_space<vmem>>, vector<1x4x256xf32>
    %1 = vector.extract_strided_slice %0 {offsets = [0, 0, 0], sizes = [1, 1, 256], strides = [1, 1, 1]} : vector<1x4x256xf32> to vector<1x1x256xf32>
    %c0_2 = arith.constant 0 : index
    %2 = memref.load %arg3[%c0_2] : memref<4xf32, #tpu.memory_space<smem>>
    %3 = vector.broadcast %2 : f32 to vector<1x1x256xf32>
    %4 = arith.mulf %1, %3 : vector<1x1x256xf32>
    %5 = vector.extract_strided_slice %0 {offsets = [0, 1, 0], sizes = [1, 1, 256], strides = [1, 1, 1]} : vector<1x4x256xf32> to vector<1x1x256xf32>
    %c1 = arith.constant 1 : index
    %6 = memref.load %arg3[%c1] : memref<4xf32, #tpu.memory_space<smem>>
    %7 = vector.broadcast %6 : f32 to vector<1x1x256xf32>
    %8 = arith.mulf %5, %7 : vector<1x1x256xf32>
    %9 = arith.addf %4, %8 : vector<1x1x256xf32>
    %10 = vector.extract_strided_slice %0 {offsets = [0, 2, 0], sizes = [1, 1, 256], strides = [1, 1, 1]} : vector<1x4x256xf32> to vector<1x1x256xf32>
    %c2 = arith.constant 2 : index
    %11 = memref.load %arg3[%c2] : memref<4xf32, #tpu.memory_space<smem>>
    %12 = vector.broadcast %11 : f32 to vector<1x1x256xf32>
    %13 = arith.mulf %10, %12 : vector<1x1x256xf32>
    %14 = arith.addf %9, %13 : vector<1x1x256xf32>
    %15 = vector.extract_strided_slice %0 {offsets = [0, 3, 0], sizes = [1, 1, 256], strides = [1, 1, 1]} : vector<1x4x256xf32> to vector<1x1x256xf32>
    %c3 = arith.constant 3 : index
    %16 = memref.load %arg3[%c3] : memref<4xf32, #tpu.memory_space<smem>>
    %17 = vector.broadcast %16 : f32 to vector<1x1x256xf32>
    %18 = arith.mulf %15, %17 : vector<1x1x256xf32>
    %19 = arith.addf %14, %18 : vector<1x1x256xf32>
    %c0_3 = arith.constant 0 : index
    %20 = memref.load %arg4[%c0_3] : memref<1xf32, #tpu.memory_space<smem>>
    %21 = vector.broadcast %20 : f32 to vector<1x1x256xf32>
    %22 = arith.addf %19, %21 : vector<1x1x256xf32>
    %23 = arith.negf %22 : vector<1x1x256xf32>
    %24 = math.exp %23 : vector<1x1x256xf32>
    %cst = arith.constant 1.000000e+00 : f32
    %25 = vector.broadcast %cst : f32 to vector<1x1x256xf32>
    %26 = arith.addf %25, %24 : vector<1x1x256xf32>
    %27 = arith.divf %25, %26 : vector<1x1x256xf32>
    %c0_4 = arith.constant 0 : index
    %c0_5 = arith.constant 0 : index
    %c0_6 = arith.constant 0 : index
    %28 = vector.load %arg5[%c0_4, %c0_5, %c0_6] : memref<1x1x256xf32, #tpu.memory_space<vmem>>, vector<1x1x256xf32>
    tpu.vector_store %arg5[%c0_4, %c0_5, %c0_6], %27 {strides = array<i32>} : memref<1x1x256xf32, #tpu.memory_space<vmem>>, vector<1x1x256xf32>,
    return
  }
  func.func @transform_0(%arg0: i32, %arg1: i32) -> (i32, i32, i32) {
    %c0_i32 = arith.constant 0 : i32
    %c0_i32_0 = arith.constant 0 : i32
    return %arg0, %c0_i32, %arg1 : i32, i32, i32
  }
  func.func @transform_1(%arg0: i32, %arg1: i32) -> i32 {
    %c0_i32 = arith.constant 0 : i32
    %c0_i32_0 = arith.constant 0 : i32
    return %c0_i32 : i32
  }
  func.func @transform_2(%arg0: i32, %arg1: i32) -> i32 {
    %c0_i32 = arith.constant 0 : i32
    %c0_i32_0 = arith.constant 0 : i32
    return %c0_i32 : i32
  }
  func.func @transform_3(%arg0: i32, %arg1: i32) -> (i32, i32, i32) {
    %c0_i32 = arith.constant 0 : i32
    %c0_i32_0 = arith.constant 0 : i32
    return %arg0, %c0_i32, %arg1 : i32, i32, i32
  }
}

</mosaic_0001>

<llo_original>
// kernel: _mask_head.1
$region0: #{_mask_head.1}
  #allocation0 [shape = 'u32[]', space=smem, size = 0x4, offset = 0x4, fixed_abs, tag = 'smem constant byte address 0x4 - core index']
  #allocation1 [shape = 'u32[144,128]{1,0:T(1,128)}', space=vmem, size = 0x12000, scoped, tag = 'internal scratch']
  #allocation2 [shape = 'f32[1]{0:T(128)S(6)}', space=smem, size = 0x200, scoped, tag = 'scoped memory for _mask_head.1']
  %s0 = inlined_call_operand.hbm [shape: f32[2,4,256], index: 0, kind: input, shape index: {}]
  %s1 = inlined_call_operand.vmem [shape: f32[4], index: 1, kind: input, shape index: {}]
  %s2 = inlined_call_operand.<no memory space> [shape: f32[1], index: 2, kind: input, shape index: {}]
  %s3 = inlined_call_operand.hbm [shape: f32[2,1,256], index: 3, kind: output, shape index: {}]
  %s4 = sld [smem:[#allocation0]]
  $region53: #{_mask_head.1} parent=0
    _
  %s6 = ssub.s32 1, %s4
  %s7 = scalar_select 0, %s6, %s4
  %8 = sst [smem:[#allocation2]] %s2
  $region1: #{_mask_head.1} parent=0
    #allocation3 [shape = 'u8[8192]{0}', space=vmem, size = 0x2000, scoped, tag = 'input window, operand 0']
    #allocation4 [shape = 's32[2]{0}', space=sflag, size = 0x8, scoped, tag = 'scoped memory for _mask_head.1']
    #allocation5 [shape = 's32[2]{0}', space=sflag, size = 0x8, scoped, tag = 'scoped memory for _mask_head.1']
    #allocation6 [shape = 's32[2]{0}', space=sflag, size = 0x8, scoped, tag = 'scoped memory for _mask_head.1']
    #allocation7 [shape = 'u8[512]{0}', space=smem, size = 0x200, scoped, tag = 'input window, operand 1, single buffered']
    #allocation8 [shape = 'u8[2048]{0}', space=vmem, size = 0x800, scoped, tag = 'output window, operand 0']
    %9 = vsyncpa [#allocation4], 0
    %s10 = scalar_lea.sflag [#allocation4], 1
    %11 = vsyncpa %s10, 0
    %12 = vsyncpa [#allocation6], 0
    %13 = vsyncpa [#allocation5], 0
    %s14 = scalar_lea.sflag [#allocation5], 1
    %15 = vsyncpa %s14, 0
    loop: start=0, step=1, limit=4
    $region2: #{_mask_head.1} parent=1 // loop_pre_header
      _
    $region3: #{_mask_head.1} parent=1 // loop_header
      %s17 = sphi 0, %s21
      %p18 = scmp.ge.s32.totalorder %s17, 4
      %s24 = sphi 0, %s36
      %s25 = sphi 0, %s32
      %s26 = sphi 0, %s24
      %s27 = sphi 0, %s25
      %s28 = sphi 0, %s26
      %s29 = sphi 0, %s27
      %s41 = sphi 0, %s43
      %s44 = sphi 0, %s41
      %s45 = sphi 0, %s44
      %s61 = sphi 0, %s45
      %s65 = sphi 0, %s65
      %s67 = sphi 0, %s65
      %s68 = sphi 0, %s67
      %s82 = sphi 0, %s68
      %s86 = sphi 0, %s86
      %s88 = sphi 0, %s86
      %s89 = sphi 0, %s88
      %s103 = sphi 0, %s89
      %s111 = sphi 0, %s113
      %s114 = sphi 0, %s111
      %s115 = sphi 0, %s114
      %s131 = sphi 0, %s115
    $region4: #{_mask_head.1} parent=1 // loop_header_branch
      %20 = sbr.rel (%p18) target = $region8
    $region5: #{_mask_head.1} parent=1 // loop_body
      %s22 = ssub.s32 %s17, 1
      %s23 = ssub.s32 %s17, 2
      %s30 = sadd.s32 1, %s25
      %p31 = scmp.ge.s32.totalorder %s30, 1
      %s32 = scalar_select %p31, 0, %s30
      %s33 = sadd.s32 1, %s24
      %s34 = scalar_select %p31, %s33, %s24
      %p35 = scmp.ge.s32.totalorder %s34, 2
      %s36 = scalar_select %p35, 0, %s34
      %s37 = ssub.s32 %s24, %s36
      %s38 = ssub.s32 %s25, %s32
      %s39 = sor.u32 %s37, %s38
      %p40 = scmp.eq.s32.totalorder %s39, 0
      %s42 = sadd.s32 %s41, 1
      %s43 = scalar_select %p40, %s41, %s42
      %p46 = pneg %p40
      %p47 = scmp.eq.s32.totalorder %s17, 1
      %p48 = por %p46, %p47
      %p49 = scmp.ne.s32.totalorder %s41, %s44
      %p50 = scmp.eq.s32.totalorder %s17, 0
      %p51 = por %p49, %p50
      %p52 = scmp.ne.s32.totalorder %s41, %s44
      %p53 = scmp.eq.s32.totalorder %s22, 1
      %p54 = por %p52, %p53
      %p55 = scmp.ne.s32.totalorder %s44, %s45
      %p56 = scmp.eq.s32.totalorder %s22, 0
      %p57 = por %p55, %p56
      %p58 = scmp.ne.s32.totalorder %s44, %s45
      %p59 = scmp.eq.s32.totalorder %s23, 1
      %p60 = por %p58, %p59
      %p62 = scmp.ne.s32.totalorder %s45, %s61
      %p63 = scmp.eq.s32.totalorder %s23, 0
      %p64 = por %p62, %p63
      %s66 = sadd.s32 %s65, 1
      %p69 = scmp.eq.s32.totalorder %s17, 1
      %p70 = scmp.ne.s32.totalorder %s65, %s67
      %p71 = scmp.eq.s32.totalorder %s17, 0
      %p72 = por %p70, %p71
      %p73 = scmp.ne.s32.totalorder %s65, %s67
      %p74 = scmp.eq.s32.totalorder %s22, 1
      %p75 = por %p73, %p74
      %p76 = scmp.ne.s32.totalorder %s67, %s68
      %p77 = scmp.eq.s32.totalorder %s22, 0
      %p78 = por %p76, %p77
      %p79 = scmp.ne.s32.totalorder %s67, %s68
      %p80 = scmp.eq.s32.totalorder %s23, 1
      %p81 = por %p79, %p80
      %p83 = scmp.ne.s32.totalorder %s68, %s82
      %p84 = scmp.eq.s32.totalorder %s23, 0
      %p85 = por %p83, %p84
      %s87 = sadd.s32 %s86, 1
      %p90 = scmp.eq.s32.totalorder %s17, 1
      %p91 = scmp.ne.s32.totalorder %s86, %s88
      %p92 = scmp.eq.s32.totalorder %s17, 0
      %p93 = por %p91, %p92
      %p94 = scmp.ne.s32.totalorder %s86, %s88
      %p95 = scmp.eq.s32.totalorder %s22, 1
      %p96 = por %p94, %p95
      %p97 = scmp.ne.s32.totalorder %s88, %s89
      %p98 = scmp.eq.s32.totalorder %s22, 0
      %p99 = por %p97, %p98
      %p100 = scmp.ne.s32.totalorder %s88, %s89
      %p101 = scmp.eq.s32.totalorder %s23, 1
      %p102 = por %p100, %p101
      %p104 = scmp.ne.s32.totalorder %s89, %s103
      %p105 = scmp.eq.s32.totalorder %s23, 0
      %p106 = por %p104, %p105
      %s107 = ssub.s32 %s24, %s36
      %s108 = ssub.s32 %s25, %s32
      %s109 = sor.u32 %s107, %s108
      %p110 = scmp.eq.s32.totalorder %s109, 0
      %s112 = sadd.s32 %s111, 1
      %s113 = scalar_select %p110, %s111, %s112
      %p116 = pneg %p110
      %p117 = scmp.eq.s32.totalorder %s17, 1
      %p118 = por %p116, %p117
      %p119 = scmp.ne.s32.totalorder %s111, %s114
      %p120 = scmp.eq.s32.totalorder %s17, 0
      %p121 = por %p119, %p120
      %p122 = scmp.ne.s32.totalorder %s111, %s114
      %p123 = scmp.eq.s32.totalorder %s22, 1
      %p124 = por %p122, %p123
      %p125 = scmp.ne.s32.totalorder %s114, %s115
      %p126 = scmp.eq.s32.totalorder %s22, 0
      %p127 = por %p125, %p126
      %p128 = scmp.ne.s32.totalorder %s114, %s115
      %p129 = scmp.eq.s32.totalorder %s23, 1
      %p130 = por %p128, %p129
      %p132 = scmp.ne.s32.totalorder %s115, %s131
      %p133 = scmp.eq.s32.totalorder %s23, 0
      %p134 = por %p132, %p133
      %p135 = scmp.le.s32.totalorder 1, %s17
      %p136 = scmp.lt.s32.totalorder %s17, 3
      %p137 = pnand %p135, %p136
      %p138 = pneg %p137
      // Predicated region
      $region9: #{_mask_head.1} parent=5 // pred_check
        _
      $region10: #{_mask_head.1} parent=5 // pred_check_branch
        %140 = sbr.rel (%p137) target = $region12
      $region11: #{_mask_head.1} parent=5 // pred_region
        %s141 = ssub.s32 %s17, 1
        // Predicated region
        $region13: #{_mask_head.1} parent=11 // pred_check
          %p142 = pneg %p78
        $region14: #{_mask_head.1} parent=11 // pred_check_branch
          %144 = sbr.rel (%p142) target = $region16
        $region15: #{_mask_head.1} parent=11 // pred_region
          %s146 = ssub.s32 16, 16
          %147 = vsyncadd [#allocation6], %s146
          %s149 = sshll.u32 %s1, 4
          %s150 = int_to_ptr.vmem [resolvable:$true] %s149
          %152 = dma.vmem_to_smem %s150, 16, [#allocation7], [#allocation6]
        $region16: #{_mask_head.1} parent=11 // pred_fallthru
          _
        // Predicated region
        $region17: #{_mask_head.1} parent=11 // pred_check
          %p153 = pneg %p99
        $region18: #{_mask_head.1} parent=11 // pred_check_branch
          %155 = sbr.rel (%p153) target = $region20
        $region19: #{_mask_head.1} parent=11 // pred_region
          _
        $region20: #{_mask_head.1} parent=11 // pred_fallthru
          _
      $region12: #{_mask_head.1} parent=5 // pred_fallthru
        _
      %p156 = scmp.lt.s32.totalorder %s17, 2
      // Predicated region
      $region21: #{_mask_head.1} parent=5 // pred_check
        %p157 = pneg %p156
      $region22: #{_mask_head.1} parent=5 // pred_check_branch
        %159 = sbr.rel (%p157) target = $region24
      $region23: #{_mask_head.1} parent=5 // pred_region
        // Predicated region
        $region25: #{_mask_head.1} parent=23 // pred_check
          %p160 = pneg %p51
        $region26: #{_mask_head.1} parent=23 // pred_check_branch
          %162 = sbr.rel (%p160) target = $region28
        $region27: #{_mask_head.1} parent=23 // pred_region
          %s163 = sand.u32 %s41, 1
          %s164 = scalar_lea.sflag [#allocation4], %s163
          %s165 = sand.u32 %s41, 1
          %s166 = smul.addr %s165, 8
          %s167 = scalar_lea.vmem [#allocation3], %s166
          %s168 = smul.u32 2, %s25
          %s170 = ssub.s32 128, 128
          %171 = vsyncadd %s164, %s170
          %s172 = smul.addr %s24, 2
          %s173 = sadd.s32 %s168, %s172
          %s174 = smul.addr %s173, 64
          %s175 = scalar_lea.hbm %s0, %s174
          %s177 = sshll.u32 %s167, 4
          %s178 = int_to_ptr.vmem [resolvable:$true] %s177
          %180 = dma.hbm_to_vmem [thread:$0]  %s175, 128, %s178, %s164
        $region28: #{_mask_head.1} parent=23 // pred_fallthru
          _
      $region24: #{_mask_head.1} parent=5 // pred_fallthru
        _
      %p181 = scmp.le.s32.totalorder 1, %s17
      %p182 = scmp.lt.s32.totalorder %s17, 3
      %p183 = pnand %p181, %p182
      %p184 = pneg %p183
      // Predicated region
      $region29: #{_mask_head.1} parent=5 // pred_check
        _
      $region30: #{_mask_head.1} parent=5 // pred_check_branch
        %186 = sbr.rel (%p183) target = $region32
      $region31: #{_mask_head.1} parent=5 // pred_region
        %s187 = ssub.s32 %s17, 1
        %s188 = sand.u32 %s44, 1
        %s189 = scalar_lea.sflag [#allocation4], %s188
        %s190 = sand.u32 %s44, 1
        %s191 = smul.addr %s190, 8
        %s192 = scalar_lea.vmem [#allocation3], %s191
        // Predicated region
        $region33: #{_mask_head.1} parent=31 // pred_check
          %p193 = pneg %p57
        $region34: #{_mask_head.1} parent=31 // pred_check_branch
          %195 = sbr.rel (%p193) target = $region36
        $region35: #{_mask_head.1} parent=31 // pred_region
          %196 = dma.done %s189, 128
        $region36: #{_mask_head.1} parent=31 // pred_fallthru
          _
        // Predicated region
        $region37: #{_mask_head.1} parent=31 // pred_check
          %p197 = pneg %p78
        $region38: #{_mask_head.1} parent=31 // pred_check_branch
          %199 = sbr.rel (%p197) target = $region40
        $region39: #{_mask_head.1} parent=31 // pred_region
          %200 = dma.done [#allocation6], 16
        $region40: #{_mask_head.1} parent=31 // pred_fallthru
          _
        %201 = sfence
        %s202 = sand.u32 %s44, 1
        %s203 = scalar_lea.sflag [#allocation4], %s202
        %s204 = sand.u32 %s44, 1
        %s205 = smul.addr %s204, 8
        %s206 = scalar_lea.vmem [#allocation3], %s205
        %p207 = pneg %p57
        %p208 = pneg %p54
        %p209 = pneg %p78
        %p210 = pneg %p75
        %p211 = pneg %p99
        %p212 = pneg %p96
        %p213 = pneg %p127
        %p214 = pneg %p124
        %s215 = sand.u32 %s114, 1
        %s216 = scalar_lea.sflag [#allocation5], %s215
        %s217 = sand.u32 %s114, 1
        %s218 = smul.addr %s217, 2
        %s219 = scalar_lea.vmem [#allocation8], %s218
        %s220 = smul.u32 2, %s27
        %s221 = smul.u32 2, %s27
        %v222 = vld [vmem:[%s192] sm:$0xff]
        %s223 = sld [smem:[#allocation7]]
        %v224 = vstv %s223
        %v225 = vmul.f32 %v222, %v224
        %s226 = sld [smem:[#allocation7 + $0x1]]
        %v227 = vstv %s226
        %v228 = vmul.f32 %v222, %v227
        %v230 = vrot.slane %v228, 5
        %v231 = vrot.slane %v230, 4
        %v233 = vadd.f32 %v225, %v231
        %s234 = sld [smem:[#allocation7 + $0x2]]
        %v235 = vstv %s234
        %v236 = vmul.f32 %v222, %v235
        %v238 = vrot.slane %v236, 6
        %v239 = vrot.slane %v238, 4
        %v241 = vadd.f32 %v233, %v239
        %s242 = sld [smem:[#allocation7 + $0x3]]
        %v243 = vstv %s242
        %v244 = vmul.f32 %v222, %v243
        %v246 = vrot.slane %v244, 7
        %v247 = vrot.slane %v246, 4
        %v249 = vadd.f32 %v241, %v247
        %s250 = sld [smem:[#allocation2]]
        %v251 = vstv %s250
        %v252 = vadd.f32 %v249, %v251
        %v253 = vxor.u32 %v252, 2147483648
        %v254 = vmul.f32 %v253, 1.442695
        %v255 = vpow.pop %v254
        %v256 = vadd.f32 %v255, 1.0
        %v257 = vrcp.pop %v256
        %v258 = vmul.f32 1.0, %v257
        %v261 = vunpack.c.l.s4 1966171168
        %v262 = vunpack.c.0.s8 %v261
        %v263 = vlaneseq
        %v264 = vshrl.u32 %v263, 7
        %v265 = vsub.s32 %v262, %v264
        %v266 = vrot.slane %v258, %v265
        %v268 = vunpack.c.l.s4 1966171168
        %v269 = vunpack.c.0.s8 %v268
        %v270 = vlaneseq
        %v271 = vshrl.u32 %v270, 7
        %v272 = vsub.s32 %v269, %v271
        %v273 = vrot.slane %v266, %v272
        %v275 = vlaneseq
        %vm276 = vcmp.ge.s32.totalorder %v275, 0
        %vm277 = vcmp.lt.s32.totalorder %v275, 256
        %vm278 = vmand %vm276, %vm277
        %279 = vst.msk [vmem:[%s219] sm:$0x3] %vm278, %v273
        %s280 = sand.u32 %s114, 1
        %s281 = scalar_lea.sflag [#allocation5], %s280
        %s282 = sand.u32 %s114, 1
        %s283 = smul.addr %s282, 2
        %s284 = scalar_lea.vmem [#allocation8], %s283
        // Predicated region
        $region41: #{_mask_head.1} parent=31 // pred_check
          %p285 = pneg %p124
        $region42: #{_mask_head.1} parent=31 // pred_check_branch
          %287 = sbr.rel (%p285) target = $region44
        $region43: #{_mask_head.1} parent=31 // pred_region
          %s288 = smul.u32 2, %s27
          %s290 = ssub.s32 32, 32
          %291 = vsyncadd %s281, %s290
          %s292 = smul.addr %s26, 2
          %s293 = sadd.s32 %s288, %s292
          %s294 = smul.addr %s293, 16
          %s295 = scalar_lea.hbm %s3, %s294
          %s297 = sshll.u32 %s284, 4
          %s298 = int_to_ptr.vmem [resolvable:$true] %s297
          %300 = dma.vmem_to_hbm [thread:$0]  %s298, 32, %s295, %s281
        $region44: #{_mask_head.1} parent=31 // pred_fallthru
          _
      $region32: #{_mask_head.1} parent=5 // pred_fallthru
        _
      %p301 = scmp.le.s32.totalorder 2, %s17
      // Predicated region
      $region45: #{_mask_head.1} parent=5 // pred_check
        %p302 = pneg %p301
      $region46: #{_mask_head.1} parent=5 // pred_check_branch
        %304 = sbr.rel (%p302) target = $region48
      $region47: #{_mask_head.1} parent=5 // pred_region
        %s305 = ssub.s32 %s17, 2
        // Predicated region
        $region49: #{_mask_head.1} parent=47 // pred_check
          %p306 = pneg %p130
        $region50: #{_mask_head.1} parent=47 // pred_check_branch
          %308 = sbr.rel (%p306) target = $region52
        $region51: #{_mask_head.1} parent=47 // pred_region
          %s309 = sand.u32 %s115, 1
          %s310 = scalar_lea.sflag [#allocation5], %s309
          %s311 = sand.u32 %s115, 1
          %s312 = smul.addr %s311, 2
          %s313 = scalar_lea.vmem [#allocation8], %s312
          %314 = dma.done %s310, 32
        $region52: #{_mask_head.1} parent=47 // pred_fallthru
          _
      $region48: #{_mask_head.1} parent=5 // pred_fallthru
        _
    $region6: #{_mask_head.1} parent=1 // loop_footer
      %s21 = sadd.s32 1, %s17
    $region7: #{_mask_head.1} parent=1 // loop_footer_branch
      %16 = sbr.rel target = $region3
    $region8: #{_mask_head.1} parent=1 // loop_exit
      _
    %315 = vsyncpa [#allocation4], 1
    %s316 = scalar_lea.sflag [#allocation4], 1
    %317 = vsyncpa %s316, 1
    %318 = vsyncpa [#allocation5], 1
    %s319 = scalar_lea.sflag [#allocation5], 1
    %320 = vsyncpa %s319, 1
    %321 = vsyncpa [#allocation6], 1
    %s322 = scalar_lea.sflag [#allocation6], 1
    %323 = vsyncpa %s322, 1

</llo_original>
